<compile_context>
chip_gen: v5e
topology: v5e:2x2
jax: 0.10.0
libtpu: 0.0.40
codegen_flags: <defaults>
</compile_context>

<pallas_src>
import functools

import jax
import jax.numpy as jnp
from jax.experimental import pallas as pl
from jax.experimental.pallas import tpu as pltpu


PACK = 8  # logical rows packed per matmul row -> PACK * label_space = 128 output lanes


def _round_up(x, m):
    return ((x + m - 1) // m) * m


def _block_diag(w, k):
    """(k*din, k*dout) block-diagonal matrix with k copies of w on the diagonal."""
    din, dout = w.shape
    eye = jnp.eye(k, dtype=w.dtype)
    return (eye[:, None, :, None] * w[None, :, None, :]).reshape(k * din, k * dout)


def _mlp_probe_kernel(x_ref, w1_ref, b1_ref, w2_ref, b2_ref, w3_ref, b3_ref, o_ref):
    # x arrives in f32 straight from HBM (no wrapper-side cast pass); cast here (VPU).
    x = x_ref[...].astype(jnp.bfloat16)
    # layer 1: bf16 operands on the MXU, f32 accumulation; bias + ReLU in f32.
    h = jnp.dot(x, w1_ref[...], preferred_element_type=jnp.float32)
    h = jnp.maximum(h + b1_ref[...], 0.0)
    # layer 2 (dropout is identity in eval).
    h = jnp.dot(h.astype(jnp.bfloat16), w2_ref[...], preferred_element_type=jnp.float32)
    h = jnp.maximum(h + b2_ref[...], 0.0)
    # layer 3: 128-lane output (PACK packed rows x label_space), no ReLU.
    o = jnp.dot(h.astype(jnp.bfloat16), w3_ref[...], preferred_element_type=jnp.float32)
    o_ref[...] = (o + b3_ref[...]).astype(o_ref.dtype)


@functools.partial(jax.jit, static_argnames=("row_tile",))
def one_word_nn_label_probe(batch, w1, b1, w2, b2, w3, b3, *, row_tile=None):
    """batch: (B, S, D) float32 -> logits (B, S, L)."""
    B, S, D = batch.shape
    R = w1.shape[1]
    L = w3.shape[1]
    N = B * S

    # --- pack PACK logical rows per matmul row (block-diagonal weights) ---------------
    pad = (-N) % PACK
    x2d = batch.reshape(N, D)
    if pad:
        # Edge case only (N not a multiple of PACK): one small pad copy of x.
        x2d = jnp.pad(x2d, ((0, pad), (0, 0)))
    Np = N + pad
    rows_p = Np // PACK
    xp = x2d.reshape(rows_p, PACK * D)          # metadata-only (contiguous, row-major)

    Dp, Rp, Lp = PACK * D, PACK * R, PACK * L   # 256, 256, 128 for this config

    # Block-diagonal weight replication (built once per call; weights are tiny).
    w1p = _block_diag(w1, PACK).astype(jnp.bfloat16)    # (Dp, Rp)
    w2p = _block_diag(w2, PACK).astype(jnp.bfloat16)    # (Rp, Rp)
    w3p = _block_diag(w3, PACK).astype(jnp.bfloat16)    # (Rp, Lp)
    b1p = jnp.tile(b1.astype(jnp.float32), (1, PACK))   # (1, Rp)
    b2p = jnp.tile(b2.astype(jnp.float32), (1, PACK))   # (1, Rp)
    b3p = jnp.tile(b3.astype(jnp.float32), (1, PACK))   # (1, Lp)

    # --- row tiling over packed rows ---------------------------------------------------
    if row_tile is None:
        # Target >=2 grid steps (both v7x TensorCores) for mid-size N; cap the packed
        # tile at 1024 rows (8192 logical) so the double-buffered x/out tiles (~6 MiB)
        # stay well inside the scoped-VMEM defaults on v5e/v6e/v7x.
        tile_p = min(1024, max(8, _round_up(pl.cdiv(rows_p, 2), 8)))
    else:
        tile_p = max(8, _round_up(pl.cdiv(int(row_tile), PACK), 8))
    # Block must not exceed the array; if it equals rows_p it matches the full dim.
    tile_p = min(tile_p, rows_p)
    grid = (int(pl.cdiv(rows_p, tile_p)),)      # boundary block clipped by Pallas (no row pad)

    outp = pl.pallas_call(
        _mlp_probe_kernel,
        out_shape=jax.ShapeDtypeStruct((rows_p, Lp), batch.dtype),
        grid_spec=pltpu.PrefetchScalarGridSpec(
            num_scalar_prefetch=0,
            grid=grid,
            in_specs=[
                pl.BlockSpec((tile_p, Dp), lambda i: (i, 0)),   # packed x rows (pipelined)
                pl.BlockSpec((Dp, Rp), lambda i: (0, 0)),       # block-diag W1 (resident)
                pl.BlockSpec((1, Rp), lambda i: (0, 0)),        # tiled b1
                pl.BlockSpec((Rp, Rp), lambda i: (0, 0)),       # block-diag W2
                pl.BlockSpec((1, Rp), lambda i: (0, 0)),        # tiled b2
                pl.BlockSpec((Rp, Lp), lambda i: (0, 0)),       # block-diag W3
                pl.BlockSpec((1, Lp), lambda i: (0, 0)),        # tiled b3
            ],
            out_specs=pl.BlockSpec((tile_p, Lp), lambda i: (i, 0)),
        ),
        compiler_params=pltpu.CompilerParams(
            dimension_semantics=("parallel",)),  # row tiles shard across v7x's 2 TCs
    )(xp, w1p, b1p, w2p, b2p, w3p, b3p)

    out2d = outp.reshape(Np, L)                 # metadata-only (contiguous)
    if pad:
        out2d = out2d[:N]
    return out2d.reshape(B, S, L)


def _reference(batch, w1, b1, w2, b2, w3, b3):
    B, S, D = batch.shape
    x = batch.reshape(-1, D)
    h = jnp.maximum(x @ w1 + b1, 0.0)
    h = jnp.maximum(h @ w2 + b2, 0.0)
    y = h @ w3 + b3
    return y.reshape(B, S, -1)


if __name__ == "__main__":
    # args['model']['hidden_dim']=32, args['probe']['maximum_rank']=32,
    # args['probe']['label_space_size']=16, probe_hidden_layers=2
    batch_size, seq_len, hidden_dim = 2, 8, 32
    rank, label_space = 32, 16

    key = jax.random.PRNGKey(0)
    k_x, k1, k2, k3, kb1, kb2, kb3 = jax.random.split(key, 7)

    x = jax.random.normal(k_x, (batch_size, seq_len, hidden_dim), dtype=jnp.float32)

    # Deterministic parameter init (weight_mu * z_mu folded in), stored (in, out).
    w1 = jax.random.normal(k1, (hidden_dim, rank), dtype=jnp.float32) * 0.1
    b1 = jax.random.normal(kb1, (1, rank), dtype=jnp.float32) * 0.1
    w2 = jax.random.normal(k2, (rank, rank), dtype=jnp.float32) * 0.1
    b2 = jax.random.normal(kb2, (1, rank), dtype=jnp.float32) * 0.1
    w3 = jax.random.normal(k3, (rank, label_space), dtype=jnp.float32) * 0.1
    b3 = jax.random.normal(kb3, (1, label_space), dtype=jnp.float32) * 0.1

    out = one_word_nn_label_probe(x, w1, b1, w2, b2, w3, b3)
    out = jax.block_until_ready(out)

    ref = _reference(x, w1, b1, w2, b2, w3, b3)
    assert out.shape == (batch_size, seq_len, label_space)
    # bf16 MXU operands (f32 accumulation) -> loosened tolerance vs f32 reference.
    assert jnp.allclose(out, ref, atol=3e-2, rtol=3e-2), float(jnp.abs(out - ref).max())

    # Exercise the N % 8 != 0 pad path, multi-step grid, and boundary-clipped last block.
    bs2, sl2 = 7, 37   # N = 259 -> padded to 264 packed as 33 rows; tile = 8 -> grid = 5
    x2 = jax.random.normal(k_x, (bs2, sl2, hidden_dim), dtype=jnp.float32)
    out2 = jax.block_until_ready(
        one_word_nn_label_probe(x2, w1, b1, w2, b2, w3, b3, row_tile=64))
    ref2 = _reference(x2, w1, b1, w2, b2, w3, b3)
    assert out2.shape == (bs2, sl2, label_space)
    assert jnp.allclose(out2, ref2, atol=3e-2, rtol=3e-2), float(jnp.abs(out2 - ref2).max())

    print("KERNEL_OK")
</pallas_src>

<mosaic_0001>
module attributes {stable_mosaic.version = 11 : i64} {
  func.func @_mlp_probe_kernel(%arg0: i32, %arg1: memref<2x256xf32, #tpu.memory_space<vmem>>, %arg2: memref<256x256xbf16, #tpu.memory_space<vmem>>, %arg3: memref<1x256xf32, #tpu.memory_space<vmem>>, %arg4: memref<256x256xbf16, #tpu.memory_space<vmem>>, %arg5: memref<1x256xf32, #tpu.memory_space<vmem>>, %arg6: memref<256x128xbf16, #tpu.memory_space<vmem>>, %arg7: memref<1x128xf32, #tpu.memory_space<vmem>>, %arg8: memref<2x128xf32, #tpu.memory_space<vmem>>) attributes {dimension_semantics = [#tpu.dimension_semantics<parallel>], iteration_bounds = array<i64: 1>, scalar_prefetch = 0 : i64, scratch_operands = 0 : i64, tpu.core_type = #tpu.core_type<tc>, window_params = [{transform_indices = @transform_0, window_bounds = array<i64: 2, 256>}, {pipeline_mode = #tpu.pipeline_mode<synchronous>, transform_indices = @transform_1, window_bounds = array<i64: 256, 256>}, {pipeline_mode = #tpu.pipeline_mode<synchronous>, transform_indices = @transform_2, window_bounds = array<i64: 1, 256>}, {pipeline_mode = #tpu.pipeline_mode<synchronous>, transform_indices = @transform_3, window_bounds = array<i64: 256, 256>}, {pipeline_mode = #tpu.pipeline_mode<synchronous>, transform_indices = @transform_4, window_bounds = array<i64: 1, 256>}, {pipeline_mode = #tpu.pipeline_mode<synchronous>, transform_indices = @transform_5, window_bounds = array<i64: 256, 128>}, {pipeline_mode = #tpu.pipeline_mode<synchronous>, transform_indices = @transform_6, window_bounds = array<i64: 1, 128>}, {transform_indices = @transform_7, window_bounds = array<i64: 2, 128>}]} {
    %c0 = arith.constant 0 : index
    %c0_0 = arith.constant 0 : index
    %0 = vector.load %arg1[%c0, %c0_0] : memref<2x256xf32, #tpu.memory_space<vmem>>, vector<2x256xf32>
    %1 = arith.truncf %0 : vector<2x256xf32> to vector<2x256xbf16>
    %c0_1 = arith.constant 0 : index
    %c0_2 = arith.constant 0 : index
    %2 = vector.load %arg2[%c0_1, %c0_2] : memref<256x256xbf16, #tpu.memory_space<vmem>>, vector<256x256xbf16>
    %cst = arith.constant dense<0.000000e+00> : vector<2x256xf32>
    %3 = tpu.matmul %1, %2, %cst {dimension_numbers = #tpu.dot_dimension_numbers<[1], [0], [0], [1], [0, 0, 1, 1], [], []>} : vector<2x256xbf16>, vector<256x256xbf16>, vector<2x256xf32> -> vector<2x256xf32>
    %c0_3 = arith.constant 0 : index
    %c0_4 = arith.constant 0 : index
    %4 = vector.load %arg3[%c0_3, %c0_4] : memref<1x256xf32, #tpu.memory_space<vmem>>, vector<1x256xf32>
    %5 = vector.broadcast %4 : vector<1x256xf32> to vector<2x256xf32>
    %6 = arith.addf %3, %5 : vector<2x256xf32>
    %cst_5 = arith.constant 0.000000e+00 : f32
    %7 = vector.broadcast %cst_5 : f32 to vector<2x256xf32>
    %8 = arith.maximumf %6, %7 : vector<2x256xf32>
    %9 = arith.truncf %8 : vector<2x256xf32> to vector<2x256xbf16>
    %c0_6 = arith.constant 0 : index
    %c0_7 = arith.constant 0 : index
    %10 = vector.load %arg4[%c0_6, %c0_7] : memref<256x256xbf16, #tpu.memory_space<vmem>>, vector<256x256xbf16>
    %cst_8 = arith.constant dense<0.000000e+00> : vector<2x256xf32>
    %11 = tpu.matmul %9, %10, %cst_8 {dimension_numbers = #tpu.dot_dimension_numbers<[1], [0], [0], [1], [0, 0, 1, 1], [], []>} : vector<2x256xbf16>, vector<256x256xbf16>, vector<2x256xf32> -> vector<2x256xf32>
    %c0_9 = arith.constant 0 : index
    %c0_10 = arith.constant 0 : index
    %12 = vector.load %arg5[%c0_9, %c0_10] : memref<1x256xf32, #tpu.memory_space<vmem>>, vector<1x256xf32>
    %13 = vector.broadcast %12 : vector<1x256xf32> to vector<2x256xf32>
    %14 = arith.addf %11, %13 : vector<2x256xf32>
    %cst_11 = arith.constant 0.000000e+00 : f32
    %15 = vector.broadcast %cst_11 : f32 to vector<2x256xf32>
    %16 = arith.maximumf %14, %15 : vector<2x256xf32>
    %17 = arith.truncf %16 : vector<2x256xf32> to vector<2x256xbf16>
    %c0_12 = arith.constant 0 : index
    %c0_13 = arith.constant 0 : index
    %18 = vector.load %arg6[%c0_12, %c0_13] : memref<256x128xbf16, #tpu.memory_space<vmem>>, vector<256x128xbf16>
    %cst_14 = arith.constant dense<0.000000e+00> : vector<2x128xf32>
    %19 = tpu.matmul %17, %18, %cst_14 {dimension_numbers = #tpu.dot_dimension_numbers<[1], [0], [0], [1], [0, 0, 1, 1], [], []>} : vector<2x256xbf16>, vector<256x128xbf16>, vector<2x128xf32> -> vector<2x128xf32>
    %c0_15 = arith.constant 0 : index
    %c0_16 = arith.constant 0 : index
    %20 = vector.load %arg7[%c0_15, %c0_16] : memref<1x128xf32, #tpu.memory_space<vmem>>, vector<1x128xf32>
    %21 = vector.broadcast %20 : vector<1x128xf32> to vector<2x128xf32>
    %22 = arith.addf %19, %21 : vector<2x128xf32>
    %c0_17 = arith.constant 0 : index
    %c0_18 = arith.constant 0 : index
    %23 = vector.load %arg8[%c0_17, %c0_18] : memref<2x128xf32, #tpu.memory_space<vmem>>, vector<2x128xf32>
    tpu.vector_store %arg8[%c0_17, %c0_18], %22 {strides = array<i32>} : memref<2x128xf32, #tpu.memory_space<vmem>>, vector<2x128xf32>,
    return
  }
  func.func @transform_0(%arg0: i32) -> (i32, i32) {
    %c0_i32 = arith.constant 0 : i32
    %c0_i32_0 = arith.constant 0 : i32
    return %arg0, %c0_i32 : i32, i32
  }
  func.func @transform_1(%arg0: i32) -> (i32, i32) {
    %c0_i32 = arith.constant 0 : i32
    %c0_i32_0 = arith.constant 0 : i32
    %c0_i32_1 = arith.constant 0 : i32
    return %c0_i32, %c0_i32_0 : i32, i32
  }
  func.func @transform_2(%arg0: i32) -> (i32, i32) {
    %c0_i32 = arith.constant 0 : i32
    %c0_i32_0 = arith.constant 0 : i32
    %c0_i32_1 = arith.constant 0 : i32
    return %c0_i32, %c0_i32_0 : i32, i32
  }
  func.func @transform_3(%arg0: i32) -> (i32, i32) {
    %c0_i32 = arith.constant 0 : i32
    %c0_i32_0 = arith.constant 0 : i32
    %c0_i32_1 = arith.constant 0 : i32
    return %c0_i32, %c0_i32_0 : i32, i32
  }
  func.func @transform_4(%arg0: i32) -> (i32, i32) {
    %c0_i32 = arith.constant 0 : i32
    %c0_i32_0 = arith.constant 0 : i32
    %c0_i32_1 = arith.constant 0 : i32
    return %c0_i32, %c0_i32_0 : i32, i32
  }
  func.func @transform_5(%arg0: i32) -> (i32, i32) {
    %c0_i32 = arith.constant 0 : i32
    %c0_i32_0 = arith.constant 0 : i32
    %c0_i32_1 = arith.constant 0 : i32
    return %c0_i32, %c0_i32_0 : i32, i32
  }
  func.func @transform_6(%arg0: i32) -> (i32, i32) {
    %c0_i32 = arith.constant 0 : i32
    %c0_i32_0 = arith.constant 0 : i32
    %c0_i32_1 = arith.constant 0 : i32
    return %c0_i32, %c0_i32_0 : i32, i32
  }
  func.func @transform_7(%arg0: i32) -> (i32, i32) {
    %c0_i32 = arith.constant 0 : i32
    %c0_i32_0 = arith.constant 0 : i32
    return %arg0, %c0_i32 : i32, i32
  }
}

</mosaic_0001>

<llo_original>
// kernel: one_word_nn_label_probe.1
$region0: #{one_word_nn_label_probe.1}
  #allocation0 [shape = 'u32[]', space=smem, size = 0x4, offset = 0x4, fixed_abs, tag = 'smem constant byte address 0x4 - core index']
  #allocation1 [shape = 'u32[72,128]{1,0:T(1,128)}', space=vmem, size = 0x9000, scoped, tag = 'internal scratch']
  %s0 = inlined_call_operand.vmem [shape: f32[2,256], index: 0, kind: input, shape index: {}]
  %s1 = inlined_call_operand.vmem [shape: bf16[256,256], index: 1, kind: input, shape index: {}]
  %s2 = inlined_call_operand.vmem [shape: f32[1,256], index: 2, kind: input, shape index: {}]
  %s3 = inlined_call_operand.vmem [shape: bf16[256,256], index: 3, kind: input, shape index: {}]
  %s4 = inlined_call_operand.vmem [shape: f32[1,256], index: 4, kind: input, shape index: {}]
  %s5 = inlined_call_operand.vmem [shape: bf16[256,128], index: 5, kind: input, shape index: {}]
  %s6 = inlined_call_operand.vmem [shape: f32[1,128], index: 6, kind: input, shape index: {}]
  %s7 = inlined_call_operand.vmem [shape: f32[2,128], index: 7, kind: output, shape index: {}]
  %s8 = sld [smem:[#allocation0]]
  $region38: #{one_word_nn_label_probe.1} parent=0
    _
  %s10 = ssub.s32 1, %s8
  %s11 = scalar_select 0, %s10, %s8
  // Predicated region
  $region2: #{one_word_nn_label_probe.1} parent=0 // pred_check
    _
  $region3: #{one_word_nn_label_probe.1} parent=0 // pred_check_branch
    %13 = sbr.rel (0) target = $region5
  $region4: #{one_word_nn_label_probe.1} parent=0 // pred_region
    _
  $region5: #{one_word_nn_label_probe.1} parent=0 // pred_fallthru
    _
  // Predicated region
  $region6: #{one_word_nn_label_probe.1} parent=0 // pred_check
    _
  $region7: #{one_word_nn_label_probe.1} parent=0 // pred_check_branch
    %15 = sbr.rel (0) target = $region9
  $region8: #{one_word_nn_label_probe.1} parent=0 // pred_region
    _
  $region9: #{one_word_nn_label_probe.1} parent=0 // pred_fallthru
    _
  // Predicated region
  $region10: #{one_word_nn_label_probe.1} parent=0 // pred_check
    _
  $region11: #{one_word_nn_label_probe.1} parent=0 // pred_check_branch
    %17 = sbr.rel (0) target = $region13
  $region12: #{one_word_nn_label_probe.1} parent=0 // pred_region
    _
  $region13: #{one_word_nn_label_probe.1} parent=0 // pred_fallthru
    _
  // Predicated region
  $region14: #{one_word_nn_label_probe.1} parent=0 // pred_check
    _
  $region15: #{one_word_nn_label_probe.1} parent=0 // pred_check_branch
    %19 = sbr.rel (0) target = $region17
  $region16: #{one_word_nn_label_probe.1} parent=0 // pred_region
    _
  $region17: #{one_word_nn_label_probe.1} parent=0 // pred_fallthru
    _
  // Predicated region
  $region18: #{one_word_nn_label_probe.1} parent=0 // pred_check
    _
  $region19: #{one_word_nn_label_probe.1} parent=0 // pred_check_branch
    %21 = sbr.rel (0) target = $region21
  $region20: #{one_word_nn_label_probe.1} parent=0 // pred_region
    _
  $region21: #{one_word_nn_label_probe.1} parent=0 // pred_fallthru
    _
  // Predicated region
  $region22: #{one_word_nn_label_probe.1} parent=0 // pred_check
    _
  $region23: #{one_word_nn_label_probe.1} parent=0 // pred_check_branch
    %23 = sbr.rel (0) target = $region25
  $region24: #{one_word_nn_label_probe.1} parent=0 // pred_region
    _
  $region25: #{one_word_nn_label_probe.1} parent=0 // pred_fallthru
    _
  // Predicated region
  $region26: #{one_word_nn_label_probe.1} parent=0 // pred_check
    _
  $region27: #{one_word_nn_label_probe.1} parent=0 // pred_check_branch
    %25 = sbr.rel (0) target = $region29
  $region28: #{one_word_nn_label_probe.1} parent=0 // pred_region
    _
  $region29: #{one_word_nn_label_probe.1} parent=0 // pred_fallthru
    _
  %v26 = vld [vmem:[%s0] sm:$0xf]
  %28 = vst [vmem:[#allocation1] ss:$4 sm:$0xff] %v26
  %v29 = vld.sshfl [vmem:[#allocation1] sm:$0xff pattern:$0x73625140]
  %v30 = vld.sshfl [vmem:[#allocation1 + $0x8] sm:$0xff pattern:$0x73625140]
  %v33 = vpack.c.bf16 %v29, %v29
  %v34 = vpack.c.bf16 %v30, %v30
  %v35 = vld [vmem:[%s1] sm:$0xff]
  %v36 = vld [vmem:[%s1 + $0x8] sm:$0xff]
  %v37 = vld [vmem:[%s1 + $0x10] sm:$0xff]
  %v38 = vld [vmem:[%s1 + $0x18] sm:$0xff]
  %v39 = vld [vmem:[%s1 + $0x20] sm:$0xff]
  %v40 = vld [vmem:[%s1 + $0x28] sm:$0xff]
  %v41 = vld [vmem:[%s1 + $0x30] sm:$0xff]
  %v42 = vld [vmem:[%s1 + $0x38] sm:$0xff]
  %v43 = vld [vmem:[%s1 + $0x40] sm:$0xff]
  %v44 = vld [vmem:[%s1 + $0x48] sm:$0xff]
  %v45 = vld [vmem:[%s1 + $0x50] sm:$0xff]
  %v46 = vld [vmem:[%s1 + $0x58] sm:$0xff]
  %v47 = vld [vmem:[%s1 + $0x60] sm:$0xff]
  %v48 = vld [vmem:[%s1 + $0x68] sm:$0xff]
  %v49 = vld [vmem:[%s1 + $0x70] sm:$0xff]
  %v50 = vld [vmem:[%s1 + $0x78] sm:$0xff]
  %v51 = vld [vmem:[%s1 + $0x80] sm:$0xff]
  %v52 = vld [vmem:[%s1 + $0x88] sm:$0xff]
  %v53 = vld [vmem:[%s1 + $0x90] sm:$0xff]
  %v54 = vld [vmem:[%s1 + $0x98] sm:$0xff]
  %v55 = vld [vmem:[%s1 + $0xa0] sm:$0xff]
  %v56 = vld [vmem:[%s1 + $0xa8] sm:$0xff]
  %v57 = vld [vmem:[%s1 + $0xb0] sm:$0xff]
  %v58 = vld [vmem:[%s1 + $0xb8] sm:$0xff]
  %v59 = vld [vmem:[%s1 + $0xc0] sm:$0xff]
  %v60 = vld [vmem:[%s1 + $0xc8] sm:$0xff]
  %v61 = vld [vmem:[%s1 + $0xd0] sm:$0xff]
  %v62 = vld [vmem:[%s1 + $0xd8] sm:$0xff]
  %v63 = vld [vmem:[%s1 + $0xe0] sm:$0xff]
  %v64 = vld [vmem:[%s1 + $0xe8] sm:$0xff]
  %v65 = vld [vmem:[%s1 + $0xf0] sm:$0xff]
  %v66 = vld [vmem:[%s1 + $0xf8] sm:$0xff]
  %v67 = vld [vmem:[%s2] sm:$0x3]
  %v69 = vperm.slane %v67, 0
  %v70 = vperm.slane %v67, 1
  %v105 = vunpack.c.l.b16 %v35
  %v106 = vunpack.c.h.b16 %v35
  %v107 = vunpack.c.l.b16 %v36
  %v108 = vunpack.c.h.b16 %v36
  %v109 = vunpack.c.l.b16 %v37
  %v110 = vunpack.c.h.b16 %v37
  %v111 = vunpack.c.l.b16 %v38
  %v112 = vunpack.c.h.b16 %v38
  %v113 = vunpack.c.l.b16 %v39
  %v114 = vunpack.c.h.b16 %v39
  %v115 = vunpack.c.l.b16 %v40
  %v116 = vunpack.c.h.b16 %v40
  %v117 = vunpack.c.l.b16 %v41
  %v118 = vunpack.c.h.b16 %v41
  %v119 = vunpack.c.l.b16 %v42
  %v120 = vunpack.c.h.b16 %v42
  %v121 = vunpack.c.l.b16 %v43
  %v122 = vunpack.c.h.b16 %v43
  %v123 = vunpack.c.l.b16 %v44
  %v124 = vunpack.c.h.b16 %v44
  %v125 = vunpack.c.l.b16 %v45
  %v126 = vunpack.c.h.b16 %v45
  %v127 = vunpack.c.l.b16 %v46
  %v128 = vunpack.c.h.b16 %v46
  %v129 = vunpack.c.l.b16 %v47
  %v130 = vunpack.c.h.b16 %v47
  %v131 = vunpack.c.l.b16 %v48
  %v132 = vunpack.c.h.b16 %v48
  %v133 = vunpack.c.l.b16 %v49
  %v134 = vunpack.c.h.b16 %v49
  %v135 = vunpack.c.l.b16 %v50
  %v136 = vunpack.c.h.b16 %v50
  %v137 = vunpack.c.l.b16 %v51
  %v138 = vunpack.c.h.b16 %v51
  %v139 = vunpack.c.l.b16 %v52
  %v140 = vunpack.c.h.b16 %v52
  %v141 = vunpack.c.l.b16 %v53
  %v142 = vunpack.c.h.b16 %v53
  %v143 = vunpack.c.l.b16 %v54
  %v144 = vunpack.c.h.b16 %v54
  %v145 = vunpack.c.l.b16 %v55
  %v146 = vunpack.c.h.b16 %v55
  %v147 = vunpack.c.l.b16 %v56
  %v148 = vunpack.c.h.b16 %v56
  %v149 = vunpack.c.l.b16 %v57
  %v150 = vunpack.c.h.b16 %v57
  %v151 = vunpack.c.l.b16 %v58
  %v152 = vunpack.c.h.b16 %v58
  %v153 = vunpack.c.l.b16 %v59
  %v154 = vunpack.c.h.b16 %v59
  %v155 = vunpack.c.l.b16 %v60
  %v156 = vunpack.c.h.b16 %v60
  %v157 = vunpack.c.l.b16 %v61
  %v158 = vunpack.c.h.b16 %v61
  %v159 = vunpack.c.l.b16 %v62
  %v160 = vunpack.c.h.b16 %v62
  %v161 = vunpack.c.l.b16 %v63
  %v162 = vunpack.c.h.b16 %v63
  %v163 = vunpack.c.l.b16 %v64
  %v164 = vunpack.c.h.b16 %v64
  %v165 = vunpack.c.l.b16 %v65
  %v166 = vunpack.c.h.b16 %v65
  %v167 = vunpack.c.l.b16 %v66
  %v168 = vunpack.c.h.b16 %v66
  %v169 = vpack.c.b16 %v107, %v105
  %v170 = vpack.c.b16 %v108, %v106
  %v171 = vpack.c.b16 %v111, %v109
  %v172 = vpack.c.b16 %v112, %v110
  %v173 = vpack.c.b16 %v115, %v113
  %v174 = vpack.c.b16 %v116, %v114
  %v175 = vpack.c.b16 %v119, %v117
  %v176 = vpack.c.b16 %v120, %v118
  %v177 = vpack.c.b16 %v123, %v121
  %v178 = vpack.c.b16 %v124, %v122
  %v179 = vpack.c.b16 %v127, %v125
  %v180 = vpack.c.b16 %v128, %v126
  %v181 = vpack.c.b16 %v131, %v129
  %v182 = vpack.c.b16 %v132, %v130
  %v183 = vpack.c.b16 %v135, %v133
  %v184 = vpack.c.b16 %v136, %v134
  %v185 = vpack.c.b16 %v139, %v137
  %v186 = vpack.c.b16 %v140, %v138
  %v187 = vpack.c.b16 %v143, %v141
  %v188 = vpack.c.b16 %v144, %v142
  %v189 = vpack.c.b16 %v147, %v145
  %v190 = vpack.c.b16 %v148, %v146
  %v191 = vpack.c.b16 %v151, %v149
  %v192 = vpack.c.b16 %v152, %v150
  %v193 = vpack.c.b16 %v155, %v153
  %v194 = vpack.c.b16 %v156, %v154
  %v195 = vpack.c.b16 %v159, %v157
  %v196 = vpack.c.b16 %v160, %v158
  %v197 = vpack.c.b16 %v163, %v161
  %v198 = vpack.c.b16 %v164, %v162
  %v199 = vpack.c.b16 %v167, %v165
  %v200 = vpack.c.b16 %v168, %v166
  %233 = vmatpush.bf16.msra.mxu0 %v183
  %234 = vmatpush.bf16.msra.mxu0 %v181
  %235 = vmatpush.bf16.msra.mxu0 %v179
  %236 = vmatpush.bf16.msra.mxu0 %v177
  %237 = vmatpush.bf16.msra.mxu0 %v175
  %238 = vmatpush.bf16.msra.mxu0 %v173
  %239 = vmatpush.bf16.msra.mxu0 %v171
  %240 = vmatpush.bf16.msra.mxu0 %v169
  %241 = vmatmul.bf16.gmra.mxu0 %v33
  %v242 = vpop.f32.mrf.mxu0
  %v243 = vadd.f32 %v69, %v242
  %v244 = vpop.f32.mrf.mxu0
  %245 = vdwg.mxu0
  %246 = vmatpush.bf16.msra.mxu0 %v199
  %247 = vmatpush.bf16.msra.mxu0 %v197
  %248 = vmatpush.bf16.msra.mxu0 %v195
  %249 = vmatpush.bf16.msra.mxu0 %v193
  %250 = vmatpush.bf16.msra.mxu0 %v191
  %251 = vmatpush.bf16.msra.mxu0 %v189
  %252 = vmatpush.bf16.msra.mxu0 %v187
  %253 = vmatpush.bf16.msra.mxu0 %v185
  %254 = vmatmul.bf16.gmra.mxu0 %v34
  %v255 = vpop.f32.mrf.mxu0
  %v256 = vadd.f32 %v243, %v255
  %v257 = vpop.f32.mrf.mxu0
  %258 = vdwg.mxu0
  %259 = vmatpush.bf16.msra.mxu0 %v184
  %260 = vmatpush.bf16.msra.mxu0 %v182
  %261 = vmatpush.bf16.msra.mxu0 %v180
  %262 = vmatpush.bf16.msra.mxu0 %v178
  %263 = vmatpush.bf16.msra.mxu0 %v176
  %264 = vmatpush.bf16.msra.mxu0 %v174
  %265 = vmatpush.bf16.msra.mxu0 %v172
  %266 = vmatpush.bf16.msra.mxu0 %v170
  %267 = vmatmul.bf16.gmra.mxu0 %v33
  %v268 = vpop.f32.mrf.mxu0
  %v269 = vadd.f32 %v70, %v268
  %v270 = vpop.f32.mrf.mxu0
  %271 = vdwg.mxu0
  %272 = vmatpush.bf16.msra.mxu0 %v200
  %273 = vmatpush.bf16.msra.mxu0 %v198
  %274 = vmatpush.bf16.msra.mxu0 %v196
  %275 = vmatpush.bf16.msra.mxu0 %v194
  %276 = vmatpush.bf16.msra.mxu0 %v192
  %277 = vmatpush.bf16.msra.mxu0 %v190
  %278 = vmatpush.bf16.msra.mxu0 %v188
  %279 = vmatpush.bf16.msra.mxu0 %v186
  %280 = vmatmul.bf16.gmra.mxu0 %v34
  %v281 = vpop.f32.mrf.mxu0
  %v282 = vadd.f32 %v269, %v281
  %v283 = vpop.f32.mrf.mxu0
  %284 = vdwg.mxu0
  %v285 = vmax.f32 %v256, 0.0
  %v286 = vmax.f32 %v282, 0.0
  %v287 = vpack.c.bf16 %v285, %v285
  %v288 = vpack.c.bf16 %v286, %v286
  %v289 = vld [vmem:[%s3] sm:$0xff]
  %v290 = vld [vmem:[%s3 + $0x8] sm:$0xff]
  %v291 = vld [vmem:[%s3 + $0x10] sm:$0xff]
  %v292 = vld [vmem:[%s3 + $0x18] sm:$0xff]
  %v293 = vld [vmem:[%s3 + $0x20] sm:$0xff]
  %v294 = vld [vmem:[%s3 + $0x28] sm:$0xff]
  %v295 = vld [vmem:[%s3 + $0x30] sm:$0xff]
  %v296 = vld [vmem:[%s3 + $0x38] sm:$0xff]
  %v297 = vld [vmem:[%s3 + $0x40] sm:$0xff]
  %v298 = vld [vmem:[%s3 + $0x48] sm:$0xff]
  %v299 = vld [vmem:[%s3 + $0x50] sm:$0xff]
  %v300 = vld [vmem:[%s3 + $0x58] sm:$0xff]
  %v301 = vld [vmem:[%s3 + $0x60] sm:$0xff]
  %v302 = vld [vmem:[%s3 + $0x68] sm:$0xff]
  %v303 = vld [vmem:[%s3 + $0x70] sm:$0xff]
  %v304 = vld [vmem:[%s3 + $0x78] sm:$0xff]
  %v305 = vld [vmem:[%s3 + $0x80] sm:$0xff]
  %v306 = vld [vmem:[%s3 + $0x88] sm:$0xff]
  %v307 = vld [vmem:[%s3 + $0x90] sm:$0xff]
  %v308 = vld [vmem:[%s3 + $0x98] sm:$0xff]
  %v309 = vld [vmem:[%s3 + $0xa0] sm:$0xff]
  %v310 = vld [vmem:[%s3 + $0xa8] sm:$0xff]
  %v311 = vld [vmem:[%s3 + $0xb0] sm:$0xff]
  %v312 = vld [vmem:[%s3 + $0xb8] sm:$0xff]
  %v313 = vld [vmem:[%s3 + $0xc0] sm:$0xff]
  %v314 = vld [vmem:[%s3 + $0xc8] sm:$0xff]
  %v315 = vld [vmem:[%s3 + $0xd0] sm:$0xff]
  %v316 = vld [vmem:[%s3 + $0xd8] sm:$0xff]
  %v317 = vld [vmem:[%s3 + $0xe0] sm:$0xff]
  %v318 = vld [vmem:[%s3 + $0xe8] sm:$0xff]
  %v319 = vld [vmem:[%s3 + $0xf0] sm:$0xff]
  %v320 = vld [vmem:[%s3 + $0xf8] sm:$0xff]
  %v321 = vld [vmem:[%s4] sm:$0x3]
  %v323 = vperm.slane %v321, 0
  %v324 = vperm.slane %v321, 1
  %v359 = vunpack.c.l.b16 %v289
  %v360 = vunpack.c.h.b16 %v289
  %v361 = vunpack.c.l.b16 %v290
  %v362 = vunpack.c.h.b16 %v290
  %v363 = vunpack.c.l.b16 %v291
  %v364 = vunpack.c.h.b16 %v291
  %v365 = vunpack.c.l.b16 %v292
  %v366 = vunpack.c.h.b16 %v292
  %v367 = vunpack.c.l.b16 %v293
  %v368 = vunpack.c.h.b16 %v293
  %v369 = vunpack.c.l.b16 %v294
  %v370 = vunpack.c.h.b16 %v294
  %v371 = vunpack.c.l.b16 %v295
  %v372 = vunpack.c.h.b16 %v295
  %v373 = vunpack.c.l.b16 %v296
  %v374 = vunpack.c.h.b16 %v296
  %v375 = vunpack.c.l.b16 %v297
  %v376 = vunpack.c.h.b16 %v297
  %v377 = vunpack.c.l.b16 %v298
  %v378 = vunpack.c.h.b16 %v298
  %v379 = vunpack.c.l.b16 %v299
  %v380 = vunpack.c.h.b16 %v299
  %v381 = vunpack.c.l.b16 %v300
  %v382 = vunpack.c.h.b16 %v300
  %v383 = vunpack.c.l.b16 %v301
  %v384 = vunpack.c.h.b16 %v301
  %v385 = vunpack.c.l.b16 %v302
  %v386 = vunpack.c.h.b16 %v302
  %v387 = vunpack.c.l.b16 %v303
  %v388 = vunpack.c.h.b16 %v303
  %v389 = vunpack.c.l.b16 %v304
  %v390 = vunpack.c.h.b16 %v304
  %v391 = vunpack.c.l.b16 %v305
  %v392 = vunpack.c.h.b16 %v305
  %v393 = vunpack.c.l.b16 %v306
  %v394 = vunpack.c.h.b16 %v306
  %v395 = vunpack.c.l.b16 %v307
  %v396 = vunpack.c.h.b16 %v307
  %v397 = vunpack.c.l.b16 %v308
  %v398 = vunpack.c.h.b16 %v308
  %v399 = vunpack.c.l.b16 %v309
  %v400 = vunpack.c.h.b16 %v309
  %v401 = vunpack.c.l.b16 %v310
  %v402 = vunpack.c.h.b16 %v310
  %v403 = vunpack.c.l.b16 %v311
  %v404 = vunpack.c.h.b16 %v311
  %v405 = vunpack.c.l.b16 %v312
  %v406 = vunpack.c.h.b16 %v312
  %v407 = vunpack.c.l.b16 %v313
  %v408 = vunpack.c.h.b16 %v313
  %v409 = vunpack.c.l.b16 %v314
  %v410 = vunpack.c.h.b16 %v314
  %v411 = vunpack.c.l.b16 %v315
  %v412 = vunpack.c.h.b16 %v315
  %v413 = vunpack.c.l.b16 %v316
  %v414 = vunpack.c.h.b16 %v316
  %v415 = vunpack.c.l.b16 %v317
  %v416 = vunpack.c.h.b16 %v317
  %v417 = vunpack.c.l.b16 %v318
  %v418 = vunpack.c.h.b16 %v318
  %v419 = vunpack.c.l.b16 %v319
  %v420 = vunpack.c.h.b16 %v319
  %v421 = vunpack.c.l.b16 %v320
  %v422 = vunpack.c.h.b16 %v320
  %v423 = vpack.c.b16 %v361, %v359
  %v424 = vpack.c.b16 %v362, %v360
  %v425 = vpack.c.b16 %v365, %v363
  %v426 = vpack.c.b16 %v366, %v364
  %v427 = vpack.c.b16 %v369, %v367
  %v428 = vpack.c.b16 %v370, %v368
  %v429 = vpack.c.b16 %v373, %v371
  %v430 = vpack.c.b16 %v374, %v372
  %v431 = vpack.c.b16 %v377, %v375
  %v432 = vpack.c.b16 %v378, %v376
  %v433 = vpack.c.b16 %v381, %v379
  %v434 = vpack.c.b16 %v382, %v380
  %v435 = vpack.c.b16 %v385, %v383
  %v436 = vpack.c.b16 %v386, %v384
  %v437 = vpack.c.b16 %v389, %v387
  %v438 = vpack.c.b16 %v390, %v388
  %v439 = vpack.c.b16 %v393, %v391
  %v440 = vpack.c.b16 %v394, %v392
  %v441 = vpack.c.b16 %v397, %v395
  %v442 = vpack.c.b16 %v398, %v396
  %v443 = vpack.c.b16 %v401, %v399
  %v444 = vpack.c.b16 %v402, %v400
  %v445 = vpack.c.b16 %v405, %v403
  %v446 = vpack.c.b16 %v406, %v404
  %v447 = vpack.c.b16 %v409, %v407
  %v448 = vpack.c.b16 %v410, %v408
  %v449 = vpack.c.b16 %v413, %v411
  %v450 = vpack.c.b16 %v414, %v412
  %v451 = vpack.c.b16 %v417, %v415
  %v452 = vpack.c.b16 %v418, %v416
  %v453 = vpack.c.b16 %v421, %v419
  %v454 = vpack.c.b16 %v422, %v420
  %487 = vmatpush.bf16.msra.mxu0 %v437
  %488 = vmatpush.bf16.msra.mxu0 %v435
  %489 = vmatpush.bf16.msra.mxu0 %v433
  %490 = vmatpush.bf16.msra.mxu0 %v431
  %491 = vmatpush.bf16.msra.mxu0 %v429
  %492 = vmatpush.bf16.msra.mxu0 %v427
  %493 = vmatpush.bf16.msra.mxu0 %v425
  %494 = vmatpush.bf16.msra.mxu0 %v423
  %495 = vmatmul.bf16.gmra.mxu0 %v287
  %v496 = vpop.f32.mrf.mxu0
  %v497 = vadd.f32 %v323, %v496
  %v498 = vpop.f32.mrf.mxu0
  %499 = vdwg.mxu0
  %500 = vmatpush.bf16.msra.mxu0 %v453
  %501 = vmatpush.bf16.msra.mxu0 %v451
  %502 = vmatpush.bf16.msra.mxu0 %v449
  %503 = vmatpush.bf16.msra.mxu0 %v447
  %504 = vmatpush.bf16.msra.mxu0 %v445
  %505 = vmatpush.bf16.msra.mxu0 %v443
  %506 = vmatpush.bf16.msra.mxu0 %v441
  %507 = vmatpush.bf16.msra.mxu0 %v439
  %508 = vmatmul.bf16.gmra.mxu0 %v288
  %v509 = vpop.f32.mrf.mxu0
  %v510 = vadd.f32 %v497, %v509
  %v511 = vpop.f32.mrf.mxu0
  %512 = vdwg.mxu0
  %513 = vmatpush.bf16.msra.mxu0 %v438
  %514 = vmatpush.bf16.msra.mxu0 %v436
  %515 = vmatpush.bf16.msra.mxu0 %v434
  %516 = vmatpush.bf16.msra.mxu0 %v432
  %517 = vmatpush.bf16.msra.mxu0 %v430
  %518 = vmatpush.bf16.msra.mxu0 %v428
  %519 = vmatpush.bf16.msra.mxu0 %v426
  %520 = vmatpush.bf16.msra.mxu0 %v424
  %521 = vmatmul.bf16.gmra.mxu0 %v287
  %v522 = vpop.f32.mrf.mxu0
  %v523 = vadd.f32 %v324, %v522
  %v524 = vpop.f32.mrf.mxu0
  %525 = vdwg.mxu0
  %526 = vmatpush.bf16.msra.mxu0 %v454
  %527 = vmatpush.bf16.msra.mxu0 %v452
  %528 = vmatpush.bf16.msra.mxu0 %v450
  %529 = vmatpush.bf16.msra.mxu0 %v448
  %530 = vmatpush.bf16.msra.mxu0 %v446
  %531 = vmatpush.bf16.msra.mxu0 %v444
  %532 = vmatpush.bf16.msra.mxu0 %v442
  %533 = vmatpush.bf16.msra.mxu0 %v440
  %534 = vmatmul.bf16.gmra.mxu0 %v288
  %v535 = vpop.f32.mrf.mxu0
  %v536 = vadd.f32 %v523, %v535
  %v537 = vpop.f32.mrf.mxu0
  %538 = vdwg.mxu0
  %v539 = vmax.f32 %v510, 0.0
  %v540 = vmax.f32 %v536, 0.0
  %v541 = vpack.c.bf16 %v539, %v539
  %v542 = vpack.c.bf16 %v540, %v540
  %v543 = vld [vmem:[%s5] sm:$0xf]
  %v544 = vld [vmem:[%s5 + $0x4] sm:$0xf]
  %v545 = vld [vmem:[%s5 + $0x8] sm:$0xf]
  %v546 = vld [vmem:[%s5 + $0xc] sm:$0xf]
  %v547 = vld [vmem:[%s5 + $0x10] sm:$0xf]
  %v548 = vld [vmem:[%s5 + $0x14] sm:$0xf]
  %v549 = vld [vmem:[%s5 + $0x18] sm:$0xf]
  %v550 = vld [vmem:[%s5 + $0x1c] sm:$0xf]
  %v551 = vld [vmem:[%s5 + $0x20] sm:$0xf]
  %v552 = vld [vmem:[%s5 + $0x24] sm:$0xf]
  %v553 = vld [vmem:[%s5 + $0x28] sm:$0xf]
  %v554 = vld [vmem:[%s5 + $0x2c] sm:$0xf]
  %v555 = vld [vmem:[%s5 + $0x30] sm:$0xf]
  %v556 = vld [vmem:[%s5 + $0x34] sm:$0xf]
  %v557 = vld [vmem:[%s5 + $0x38] sm:$0xf]
  %v558 = vld [vmem:[%s5 + $0x3c] sm:$0xf]
  %v559 = vld [vmem:[%s5 + $0x40] sm:$0xf]
  %v560 = vld [vmem:[%s5 + $0x44] sm:$0xf]
  %v561 = vld [vmem:[%s5 + $0x48] sm:$0xf]
  %v562 = vld [vmem:[%s5 + $0x4c] sm:$0xf]
  %v563 = vld [vmem:[%s5 + $0x50] sm:$0xf]
  %v564 = vld [vmem:[%s5 + $0x54] sm:$0xf]
  %v565 = vld [vmem:[%s5 + $0x58] sm:$0xf]
  %v566 = vld [vmem:[%s5 + $0x5c] sm:$0xf]
  %v567 = vld [vmem:[%s5 + $0x60] sm:$0xf]
  %v568 = vld [vmem:[%s5 + $0x64] sm:$0xf]
  %v569 = vld [vmem:[%s5 + $0x68] sm:$0xf]
  %v570 = vld [vmem:[%s5 + $0x6c] sm:$0xf]
  %v571 = vld [vmem:[%s5 + $0x70] sm:$0xf]
  %v572 = vld [vmem:[%s5 + $0x74] sm:$0xf]
  %v573 = vld [vmem:[%s5 + $0x78] sm:$0xf]
  %v574 = vld [vmem:[%s5 + $0x7c] sm:$0xf]
  %v575 = vld [vmem:[%s6] sm:$0x1]
  %v577 = vperm.slane %v575, 0
  %v611 = vunpack.c.l.b16 %v543
  %v612 = vunpack.c.l.b16 %v544
  %v613 = vunpack.c.l.b16 %v545
  %v614 = vunpack.c.l.b16 %v546
  %v615 = vunpack.c.l.b16 %v547
  %v616 = vunpack.c.l.b16 %v548
  %v617 = vunpack.c.l.b16 %v549
  %v618 = vunpack.c.l.b16 %v550
  %v619 = vunpack.c.l.b16 %v551
  %v620 = vunpack.c.l.b16 %v552
  %v621 = vunpack.c.l.b16 %v553
  %v622 = vunpack.c.l.b16 %v554
  %v623 = vunpack.c.l.b16 %v555
  %v624 = vunpack.c.l.b16 %v556
  %v625 = vunpack.c.l.b16 %v557
  %v626 = vunpack.c.l.b16 %v558
  %v627 = vunpack.c.l.b16 %v559
  %v628 = vunpack.c.l.b16 %v560
  %v629 = vunpack.c.l.b16 %v561
  %v630 = vunpack.c.l.b16 %v562
  %v631 = vunpack.c.l.b16 %v563
  %v632 = vunpack.c.l.b16 %v564
  %v633 = vunpack.c.l.b16 %v565
  %v634 = vunpack.c.l.b16 %v566
  %v635 = vunpack.c.l.b16 %v567
  %v636 = vunpack.c.l.b16 %v568
  %v637 = vunpack.c.l.b16 %v569
  %v638 = vunpack.c.l.b16 %v570
  %v639 = vunpack.c.l.b16 %v571
  %v640 = vunpack.c.l.b16 %v572
  %v641 = vunpack.c.l.b16 %v573
  %v642 = vunpack.c.l.b16 %v574
  %v643 = vpack.c.b16 %v612, %v611
  %v644 = vpack.c.b16 %v614, %v613
  %v645 = vpack.c.b16 %v616, %v615
  %v646 = vpack.c.b16 %v618, %v617
  %v647 = vpack.c.b16 %v620, %v619
  %v648 = vpack.c.b16 %v622, %v621
  %v649 = vpack.c.b16 %v624, %v623
  %v650 = vpack.c.b16 %v626, %v625
  %v651 = vpack.c.b16 %v628, %v627
  %v652 = vpack.c.b16 %v630, %v629
  %v653 = vpack.c.b16 %v632, %v631
  %v654 = vpack.c.b16 %v634, %v633
  %v655 = vpack.c.b16 %v636, %v635
  %v656 = vpack.c.b16 %v638, %v637
  %v657 = vpack.c.b16 %v640, %v639
  %v658 = vpack.c.b16 %v642, %v641
  %675 = vmatpush.bf16.msra.mxu0 %v650
  %676 = vmatpush.bf16.msra.mxu0 %v649
  %677 = vmatpush.bf16.msra.mxu0 %v648
  %678 = vmatpush.bf16.msra.mxu0 %v647
  %679 = vmatpush.bf16.msra.mxu0 %v646
  %680 = vmatpush.bf16.msra.mxu0 %v645
  %681 = vmatpush.bf16.msra.mxu0 %v644
  %682 = vmatpush.bf16.msra.mxu0 %v643
  %683 = vmatmul.bf16.gmra.mxu0 %v541
  %v684 = vpop.f32.mrf.mxu0
  %v685 = vadd.f32 %v577, %v684
  %v686 = vpop.f32.mrf.mxu0
  %687 = vdwg.mxu0
  %688 = vmatpush.bf16.msra.mxu0 %v658
  %689 = vmatpush.bf16.msra.mxu0 %v657
  %690 = vmatpush.bf16.msra.mxu0 %v656
  %691 = vmatpush.bf16.msra.mxu0 %v655
  %692 = vmatpush.bf16.msra.mxu0 %v654
  %693 = vmatpush.bf16.msra.mxu0 %v653
  %694 = vmatpush.bf16.msra.mxu0 %v652
  %695 = vmatpush.bf16.msra.mxu0 %v651
  %696 = vmatmul.bf16.gmra.mxu0 %v542
  %v697 = vpop.f32.mrf.mxu0
  %v698 = vadd.f32 %v685, %v697
  %v699 = vpop.f32.mrf.mxu0
  %700 = vdwg.mxu0
  %701 = vst [vmem:[%s7] sm:$0x3] %v698
  // Predicated region
  $region30: #{one_word_nn_label_probe.1} parent=0 // pred_check
    _
  $region31: #{one_word_nn_label_probe.1} parent=0 // pred_check_branch
    %703 = sbr.rel (0) target = $region33
  $region32: #{one_word_nn_label_probe.1} parent=0 // pred_region
    _
  $region33: #{one_word_nn_label_probe.1} parent=0 // pred_fallthru
    _
  // Predicated region
  $region34: #{one_word_nn_label_probe.1} parent=0 // pred_check
    _
  $region35: #{one_word_nn_label_probe.1} parent=0 // pred_check_branch
    %705 = sbr.rel (0) target = $region37
  $region36: #{one_word_nn_label_probe.1} parent=0 // pred_region
    _
  $region37: #{one_word_nn_label_probe.1} parent=0 // pred_fallthru
    _

</llo_original>
